<compile_context>
chip_gen: v7x
topology: tpu7x:2x2x1
jax: 0.10.0
libtpu: 0.0.40
codegen_flags: <defaults>
</compile_context>

<pallas_src>
import functools

import jax
import jax.numpy as jnp
from jax.experimental import pallas as pl
from jax.experimental.pallas import tpu as pltpu


def _appnp_kernel(x_ref, nagg_ref, h_ref, nbr_ref, xo_ref, naggo_ref, *, alpha):
    # x_ref/h_ref:      (bn, F)
    # nagg_ref/nbr_ref: (bn, K, F)
    f32 = jnp.float32
    x = x_ref[...]
    nagg = nagg_ref[...]

    # --- center-node path (small, keep f32 accumulation) --------------------
    # sum_aggregation: center node <- self + sum of neighbor aggregates
    agg_x = x.astype(f32) + jnp.sum(nagg, axis=1, dtype=f32)          # (bn, F)
    xo_ref[...] = (f32(1.0 - alpha) * agg_x
                   + f32(alpha) * h_ref[...].astype(f32)).astype(xo_ref.dtype)

    # --- neighbor path (large, keep in storage dtype to save VMEM) ----------
    sdt = nagg.dtype
    one_m_a = jnp.asarray(1.0 - alpha, dtype=sdt)
    a = jnp.asarray(alpha, dtype=sdt)
    # sum_aggregation: each neighbor aggregate <- self + center node
    agg_n = nagg + x[:, None, :]                                      # (bn, K, F)
    naggo_ref[...] = (one_m_a * agg_n + a * nbr_ref[...]).astype(naggo_ref.dtype)


def _round_up(v, m):
    return ((v + m - 1) // m) * m


def _vmem_defaults():
    """Generation-aware VMEM limit / tile budget / tile cap / core count."""
    try:
        phys = int(pltpu.get_tpu_info().vmem_capacity_bytes)
    except Exception:
        phys = 64 << 20  # conservative fallback (v7x-sized)
    # v7x has 64 MiB VMEM per TensorCore and 2 TensorCores; v5e/v6e have
    # 128 MiB and a single TensorCore.
    num_cores = 2 if phys <= (64 << 20) else 1
    vmem_limit = min(phys // 2, 96 << 20)        # 32 MiB (v7x) / 64 MiB (v5e/v6e)
    vmem_budget = (vmem_limit * 3) // 4          # headroom under the scoped limit
    max_block_n = 512 if num_cores > 1 else 1024
    return vmem_limit, vmem_budget, max_block_n, num_cores


def _pick_block_n(n, k, f, itemsize, *, vmem_budget_bytes, max_block_n, num_cores):
    """Pick the row-tile size from a VMEM budget (buffers + in-kernel temps)."""
    # Per row of a tile:
    #  - 6 pipeline buffers (x, h, x_out: F each; nagg, nbr, nagg_out: K*F each),
    #    double-buffered, in the storage dtype;
    #  - ~3 f32 (F,) temporaries for the center-node path;
    #  - ~2 storage-dtype + 1 f32-accumulator (K*F,) temporaries for the
    #    neighbor path.
    row_bytes = (2 * itemsize * (3 * f + 3 * k * f)
                 + 3 * 4 * f
                 + (2 * itemsize + 4) * k * f)
    bn = max(1, vmem_budget_bytes // row_bytes)
    bn = min(bn, max_block_n)

    # Sublane alignment: 8 for 32-bit dtypes, 16 for bf16/f16, 32 for 8-bit.
    align = 8 if itemsize >= 4 else (16 if itemsize == 2 else 32)
    # No point in a tile larger than the (aligned) problem.
    bn = min(bn, _round_up(n, align))

    # Only the 2-TensorCore chip benefits from forcing >= 2 grid steps; keep
    # the step count a multiple of num_cores for load balance.
    if num_cores > 1 and n > align:
        bn = min(bn, _round_up(pl.cdiv(n, num_cores), align))
        steps = pl.cdiv(n, bn)
        if steps > 1 and steps % num_cores:
            bn = _round_up(pl.cdiv(n, steps + 1), align)

    bn = max(align, (bn // align) * align)
    return int(bn)


def graph_appnp(x, neighbor_agg, h, neighbor, alpha, *, block_n=None,
                vmem_limit_bytes=None):
    """Pallas implementation of GraphAppnp.forward.

    Args:
      x:            (N, F) center-node embeddings (current iterate).
      neighbor_agg: (N, K, F) neighbor running aggregates.
      h:            (N, F) initial center-node features.
      neighbor:     (N, K, F) initial neighbor features.
      alpha:        python float teleport probability.
    Returns:
      (x_out, neighbor_agg_out) with the same shapes as (x, neighbor_agg).
    """
    N, F = x.shape
    _, K, _ = neighbor_agg.shape
    assert h.shape == (N, F)
    assert neighbor.shape == (N, K, F)
    assert neighbor_agg.shape == (N, K, F)

    itemsize = jnp.dtype(x.dtype).itemsize
    limit, budget, max_bn, num_cores = _vmem_defaults()
    if vmem_limit_bytes is None:
        vmem_limit_bytes = limit
    if block_n is None:
        block_n = _pick_block_n(N, K, F, itemsize,
                                vmem_budget_bytes=budget,
                                max_block_n=max_bn,
                                num_cores=num_cores)

    # Partial last block (N % block_n != 0) is handled by Pallas: OOB input
    # rows are don't-care and OOB output rows are dropped on writeback.
    grid_n = pl.cdiv(N, block_n)

    kernel = functools.partial(_appnp_kernel, alpha=float(alpha))

    vec_spec = pl.BlockSpec((block_n, F), lambda i: (i, 0))
    nbr_spec = pl.BlockSpec((block_n, K, F), lambda i: (i, 0, 0))

    x_out, nagg_out = pl.pallas_call(
        kernel,
        grid=(grid_n,),
        in_specs=[vec_spec, nbr_spec, vec_spec, nbr_spec],
        out_specs=(vec_spec, nbr_spec),
        out_shape=(
            jax.ShapeDtypeStruct((N, F), x.dtype),
            jax.ShapeDtypeStruct((N, K, F), neighbor_agg.dtype),
        ),
        # x -> x_out, neighbor_agg -> neighbor_agg_out: reuse the caller's HBM
        # buffers across the iterative APPNP propagation loop.
        input_output_aliases={0: 0, 1: 1},
        compiler_params=pltpu.CompilerParams(
            dimension_semantics=("parallel",),
            vmem_limit_bytes=int(vmem_limit_bytes),
        ),
    )(x, neighbor_agg, h, neighbor)

    return x_out, nagg_out


def _reference(x, neighbor_agg, h, neighbor, alpha):
    """Pure-JAX reference mirroring the (assumed) PyTorch semantics."""
    agg_x = x + jnp.sum(neighbor_agg, axis=1)
    agg_n = neighbor_agg + x[:, None, :]
    x_out = (1.0 - alpha) * agg_x + alpha * h
    nagg_out = (1.0 - alpha) * agg_n + alpha * neighbor
    return x_out, nagg_out


if __name__ == "__main__":
    N, K, F = 72, 8, 128
    alpha = 0.1

    key = jax.random.PRNGKey(0)
    k1, k2, k3, k4 = jax.random.split(key, 4)
    x = jax.random.normal(k1, (N, F), dtype=jnp.float32)
    h = jax.random.normal(k2, (N, F), dtype=jnp.float32)
    neighbor_agg = jax.random.normal(k3, (N, K, F), dtype=jnp.float32)
    neighbor = jax.random.normal(k4, (N, K, F), dtype=jnp.float32)

    x_ref, nagg_ref = _reference(x, neighbor_agg, h, neighbor, alpha)

    # Auto-tuned block size (divisible or partial depending on chip).
    run = jax.jit(functools.partial(graph_appnp, alpha=alpha))
    x_out, nagg_out = run(x, neighbor_agg, h, neighbor)
    jax.block_until_ready((x_out, nagg_out))
    assert x_out.shape == (N, F) and nagg_out.shape == (N, K, F)
    assert jnp.allclose(x_out, x_ref, atol=1e-5, rtol=1e-5)
    assert jnp.allclose(nagg_out, nagg_ref, atol=1e-5, rtol=1e-5)

    # Explicit non-divisible block size to exercise the partial-last-block
    # (no-pad) path on every chip generation.
    run_partial = jax.jit(functools.partial(graph_appnp, alpha=alpha, block_n=48))
    x_out2, nagg_out2 = run_partial(x, neighbor_agg, h, neighbor)
    jax.block_until_ready((x_out2, nagg_out2))
    assert jnp.allclose(x_out2, x_ref, atol=1e-5, rtol=1e-5)
    assert jnp.allclose(nagg_out2, nagg_ref, atol=1e-5, rtol=1e-5)

    print("KERNEL_OK")
</pallas_src>

<mosaic_0001>
module attributes {stable_mosaic.version = 11 : i64} {
  func.func @_appnp_kernel(%arg0: i32, %arg1: memref<40x128xf32, #tpu.memory_space<vmem>>, %arg2: memref<40x8x128xf32, #tpu.memory_space<vmem>>, %arg3: memref<40x128xf32, #tpu.memory_space<vmem>>, %arg4: memref<40x8x128xf32, #tpu.memory_space<vmem>>, %arg5: memref<40x128xf32, #tpu.memory_space<vmem>>, %arg6: memref<40x8x128xf32, #tpu.memory_space<vmem>>) attributes {dimension_semantics = [#tpu.dimension_semantics<parallel>], iteration_bounds = array<i64: 2>, scalar_prefetch = 0 : i64, scratch_operands = 0 : i64, tpu.core_type = #tpu.core_type<tc>, window_params = [{transform_indices = @transform_0, window_bounds = array<i64: 40, 128>}, {transform_indices = @transform_1, window_bounds = array<i64: 40, 8, 128>}, {transform_indices = @transform_2, window_bounds = array<i64: 40, 128>}, {transform_indices = @transform_3, window_bounds = array<i64: 40, 8, 128>}, {transform_indices = @transform_4, window_bounds = array<i64: 40, 128>}, {transform_indices = @transform_5, window_bounds = array<i64: 40, 8, 128>}]} {
    %c0 = arith.constant 0 : index
    %c0_0 = arith.constant 0 : index
    %0 = vector.load %arg1[%c0, %c0_0] : memref<40x128xf32, #tpu.memory_space<vmem>>, vector<40x128xf32>
    %c0_1 = arith.constant 0 : index
    %c0_2 = arith.constant 0 : index
    %c0_3 = arith.constant 0 : index
    %1 = vector.load %arg2[%c0_1, %c0_2, %c0_3] : memref<40x8x128xf32, #tpu.memory_space<vmem>>, vector<40x8x128xf32>
    %cst = arith.constant dense<0.000000e+00> : vector<40x128xf32>
    %2 = vector.multi_reduction <add>, %1, %cst [1] : vector<40x8x128xf32> to vector<40x128xf32>
    %3 = arith.addf %0, %2 : vector<40x128xf32>
    %cst_4 = arith.constant 0.899999976 : f32
    %4 = vector.broadcast %cst_4 : f32 to vector<40x128xf32>
    %5 = arith.mulf %4, %3 : vector<40x128xf32>
    %c0_5 = arith.constant 0 : index
    %c0_6 = arith.constant 0 : index
    %6 = vector.load %arg3[%c0_5, %c0_6] : memref<40x128xf32, #tpu.memory_space<vmem>>, vector<40x128xf32>
    %cst_7 = arith.constant 1.000000e-01 : f32
    %7 = vector.broadcast %cst_7 : f32 to vector<40x128xf32>
    %8 = arith.mulf %7, %6 : vector<40x128xf32>
    %9 = arith.addf %5, %8 : vector<40x128xf32>
    %c0_8 = arith.constant 0 : index
    %c0_9 = arith.constant 0 : index
    %10 = vector.load %arg5[%c0_8, %c0_9] : memref<40x128xf32, #tpu.memory_space<vmem>>, vector<40x128xf32>
    tpu.vector_store %arg5[%c0_8, %c0_9], %9 {strides = array<i32>} : memref<40x128xf32, #tpu.memory_space<vmem>>, vector<40x128xf32>,
    %11 = vector.shape_cast %0 : vector<40x128xf32> to vector<40x1x128xf32>
    %12 = vector.broadcast %11 : vector<40x1x128xf32> to vector<40x8x128xf32>
    %13 = arith.addf %1, %12 : vector<40x8x128xf32>
    %cst_10 = arith.constant 0.899999976 : f32
    %14 = vector.broadcast %cst_10 : f32 to vector<40x8x128xf32>
    %15 = arith.mulf %14, %13 : vector<40x8x128xf32>
    %c0_11 = arith.constant 0 : index
    %c0_12 = arith.constant 0 : index
    %c0_13 = arith.constant 0 : index
    %16 = vector.load %arg4[%c0_11, %c0_12, %c0_13] : memref<40x8x128xf32, #tpu.memory_space<vmem>>, vector<40x8x128xf32>
    %cst_14 = arith.constant 1.000000e-01 : f32
    %17 = vector.broadcast %cst_14 : f32 to vector<40x8x128xf32>
    %18 = arith.mulf %17, %16 : vector<40x8x128xf32>
    %19 = arith.addf %15, %18 : vector<40x8x128xf32>
    %c0_15 = arith.constant 0 : index
    %c0_16 = arith.constant 0 : index
    %c0_17 = arith.constant 0 : index
    %20 = vector.load %arg6[%c0_15, %c0_16, %c0_17] : memref<40x8x128xf32, #tpu.memory_space<vmem>>, vector<40x8x128xf32>
    tpu.vector_store %arg6[%c0_15, %c0_16, %c0_17], %19 {strides = array<i32>} : memref<40x8x128xf32, #tpu.memory_space<vmem>>, vector<40x8x128xf32>,
    return
  }
  func.func @transform_0(%arg0: i32) -> (i32, i32) {
    %c0_i32 = arith.constant 0 : i32
    %c0_i32_0 = arith.constant 0 : i32
    return %arg0, %c0_i32 : i32, i32
  }
  func.func @transform_1(%arg0: i32) -> (i32, i32, i32) {
    %c0_i32 = arith.constant 0 : i32
    %c0_i32_0 = arith.constant 0 : i32
    %c0_i32_1 = arith.constant 0 : i32
    return %arg0, %c0_i32, %c0_i32_0 : i32, i32, i32
  }
  func.func @transform_2(%arg0: i32) -> (i32, i32) {
    %c0_i32 = arith.constant 0 : i32
    %c0_i32_0 = arith.constant 0 : i32
    return %arg0, %c0_i32 : i32, i32
  }
  func.func @transform_3(%arg0: i32) -> (i32, i32, i32) {
    %c0_i32 = arith.constant 0 : i32
    %c0_i32_0 = arith.constant 0 : i32
    %c0_i32_1 = arith.constant 0 : i32
    return %arg0, %c0_i32, %c0_i32_0 : i32, i32, i32
  }
  func.func @transform_4(%arg0: i32) -> (i32, i32) {
    %c0_i32 = arith.constant 0 : i32
    %c0_i32_0 = arith.constant 0 : i32
    return %arg0, %c0_i32 : i32, i32
  }
  func.func @transform_5(%arg0: i32) -> (i32, i32, i32) {
    %c0_i32 = arith.constant 0 : i32
    %c0_i32_0 = arith.constant 0 : i32
    %c0_i32_1 = arith.constant 0 : i32
    return %arg0, %c0_i32, %c0_i32_0 : i32, i32, i32
  }
}

</mosaic_0001>

<llo_original>
// kernel: graph_appnp.1
$region0: #{graph_appnp.1}
  #allocation0 [shape = 'u32[]', space=smem, size = 0x4, offset = 0x4, fixed_abs, tag = 'smem constant byte address 0x4 - core index']
  #allocation1 [shape = 'u32[144,128]{1,0:T(1,128)}', space=vmem, size = 0x12000, scoped, tag = 'internal scratch']
  %s0 = inlined_call_operand.hbm [shape: f32[72,128], index: 0, kind: input, shape index: {}, may-alias: {0,4}]
  %s1 = inlined_call_operand.hbm [shape: f32[72,8,128], index: 1, kind: input, shape index: {}, may-alias: {1,5}]
  %s2 = inlined_call_operand.vmem [shape: f32[72,128], index: 2, kind: input, shape index: {}]
  %s3 = inlined_call_operand.vmem [shape: f32[72,8,128], index: 3, kind: input, shape index: {}]
  %s4 = inlined_call_operand.hbm [shape: f32[72,128], index: 4, kind: output, shape index: {0}, may-alias: {0,4}]
  %s5 = inlined_call_operand.hbm [shape: f32[72,8,128], index: 5, kind: output, shape index: {1}, may-alias: {1,5}]
  %6 = xla_tuple %s4, %s5
  %s7 = sld [smem:[#allocation0]]
  $region65: #{graph_appnp.1} parent=0
    _
  %s9 = ssub.s32 1, %s7
  %s10 = scalar_select 0, %s9, %s7
  $region1: #{graph_appnp.1} parent=0
    #allocation2 [shape = 'u8[40960]{0}', space=vmem, size = 0xa000, scoped, tag = 'input window, operand 0']
    #allocation3 [shape = 's32[2]{0}', space=sflag, size = 0x8, scoped, tag = 'scoped memory for graph_appnp.1']
    #allocation4 [shape = 's32[2]{0}', space=sflag, size = 0x8, scoped, tag = 'scoped memory for graph_appnp.1']
    #allocation5 [shape = 'u8[327680]{0}', space=vmem, size = 0x50000, scoped, tag = 'input window, operand 1']
    #allocation6 [shape = 's32[2]{0}', space=sflag, size = 0x8, scoped, tag = 'scoped memory for graph_appnp.1']
    #allocation7 [shape = 'u8[40960]{0}', space=vmem, size = 0xa000, scoped, tag = 'output window, operand 0']
    #allocation8 [shape = 'u8[327680]{0}', space=vmem, size = 0x50000, scoped, tag = 'output window, operand 1']
    #allocation9 [shape = 's32[2]{0}', space=sflag, size = 0x8, scoped, tag = 'scoped memory for graph_appnp.1']
    %11 = vsyncpa [#allocation3], 0
    %s12 = scalar_lea.sflag [#allocation3], 1
    %13 = vsyncpa %s12, 0
    %14 = vsyncpa [#allocation6], 0
    %s15 = scalar_lea.sflag [#allocation6], 1
    %16 = vsyncpa %s15, 0
    %17 = vsyncpa [#allocation4], 0
    %s18 = scalar_lea.sflag [#allocation4], 1
    %19 = vsyncpa %s18, 0
    %20 = vsyncpa [#allocation9], 0
    %s21 = scalar_lea.sflag [#allocation9], 1
    %22 = vsyncpa %s21, 0
    loop: start=0, step=1, limit=4
    $region2: #{graph_appnp.1} parent=1 // loop_pre_header
      _
    $region3: #{graph_appnp.1} parent=1 // loop_header
      %s24 = sphi 0, %s28
      %p25 = scmp.ge.s32.totalorder %s24, 4
      %s34 = sphi 0, %s36
      %s37 = sphi 0, %s34
      %s38 = sphi 0, %s37
      %s54 = sphi 0, %s38
      %s60 = sphi 0, %s62
      %s63 = sphi 0, %s60
      %s64 = sphi 0, %s63
      %s80 = sphi 0, %s64
      %s86 = sphi 0, %s88
      %s89 = sphi 0, %s86
      %s90 = sphi 0, %s89
      %s106 = sphi 0, %s90
      %s112 = sphi 0, %s114
      %s115 = sphi 0, %s112
      %s116 = sphi 0, %s115
      %s132 = sphi 0, %s116
      %s138 = sphi 0, %s140
      %s141 = sphi 0, %s138
      %s142 = sphi 0, %s141
      %s158 = sphi 0, %s142
      %s164 = sphi 0, %s166
      %s167 = sphi 0, %s164
      %s168 = sphi 0, %s167
      %s184 = sphi 0, %s168
    $region4: #{graph_appnp.1} parent=1 // loop_header_branch
      %27 = sbr.rel (%p25) target = $region8
    $region5: #{graph_appnp.1} parent=1 // loop_body
      %s29 = ssub.s32 %s24, 1
      %s30 = ssub.s32 %s24, 2
      %s31 = sadd.s32 %s24, 1
      %s32 = ssub.s32 %s24, %s31
      %p33 = scmp.eq.s32.totalorder %s32, 0
      %s35 = sadd.s32 %s34, 1
      %s36 = scalar_select %p33, %s34, %s35
      %p39 = pneg %p33
      %p40 = scmp.eq.s32.totalorder %s24, 1
      %p41 = por %p39, %p40
      %p42 = scmp.ne.s32.totalorder %s34, %s37
      %p43 = scmp.eq.s32.totalorder %s24, 0
      %p44 = por %p42, %p43
      %p45 = scmp.ne.s32.totalorder %s34, %s37
      %p46 = scmp.eq.s32.totalorder %s29, 1
      %p47 = por %p45, %p46
      %p48 = scmp.ne.s32.totalorder %s37, %s38
      %p49 = scmp.eq.s32.totalorder %s29, 0
      %p50 = por %p48, %p49
      %p51 = scmp.ne.s32.totalorder %s37, %s38
      %p52 = scmp.eq.s32.totalorder %s30, 1
      %p53 = por %p51, %p52
      %p55 = scmp.ne.s32.totalorder %s38, %s54
      %p56 = scmp.eq.s32.totalorder %s30, 0
      %p57 = por %p55, %p56
      %s58 = ssub.s32 %s24, %s31
      %p59 = scmp.eq.s32.totalorder %s58, 0
      %s61 = sadd.s32 %s60, 1
      %s62 = scalar_select %p59, %s60, %s61
      %p65 = pneg %p59
      %p66 = scmp.eq.s32.totalorder %s24, 1
      %p67 = por %p65, %p66
      %p68 = scmp.ne.s32.totalorder %s60, %s63
      %p69 = scmp.eq.s32.totalorder %s24, 0
      %p70 = por %p68, %p69
      %p71 = scmp.ne.s32.totalorder %s60, %s63
      %p72 = scmp.eq.s32.totalorder %s29, 1
      %p73 = por %p71, %p72
      %p74 = scmp.ne.s32.totalorder %s63, %s64
      %p75 = scmp.eq.s32.totalorder %s29, 0
      %p76 = por %p74, %p75
      %p77 = scmp.ne.s32.totalorder %s63, %s64
      %p78 = scmp.eq.s32.totalorder %s30, 1
      %p79 = por %p77, %p78
      %p81 = scmp.ne.s32.totalorder %s64, %s80
      %p82 = scmp.eq.s32.totalorder %s30, 0
      %p83 = por %p81, %p82
      %s84 = ssub.s32 %s24, %s31
      %p85 = scmp.eq.s32.totalorder %s84, 0
      %s87 = sadd.s32 %s86, 1
      %s88 = scalar_select %p85, %s86, %s87
      %p91 = pneg %p85
      %p92 = scmp.eq.s32.totalorder %s24, 1
      %p93 = por %p91, %p92
      %p94 = scmp.ne.s32.totalorder %s86, %s89
      %p95 = scmp.eq.s32.totalorder %s24, 0
      %p96 = por %p94, %p95
      %p97 = scmp.ne.s32.totalorder %s86, %s89
      %p98 = scmp.eq.s32.totalorder %s29, 1
      %p99 = por %p97, %p98
      %p100 = scmp.ne.s32.totalorder %s89, %s90
      %p101 = scmp.eq.s32.totalorder %s29, 0
      %p102 = por %p100, %p101
      %p103 = scmp.ne.s32.totalorder %s89, %s90
      %p104 = scmp.eq.s32.totalorder %s30, 1
      %p105 = por %p103, %p104
      %p107 = scmp.ne.s32.totalorder %s90, %s106
      %p108 = scmp.eq.s32.totalorder %s30, 0
      %p109 = por %p107, %p108
      %s110 = ssub.s32 %s24, %s31
      %p111 = scmp.eq.s32.totalorder %s110, 0
      %s113 = sadd.s32 %s112, 1
      %s114 = scalar_select %p111, %s112, %s113
      %p117 = pneg %p111
      %p118 = scmp.eq.s32.totalorder %s24, 1
      %p119 = por %p117, %p118
      %p120 = scmp.ne.s32.totalorder %s112, %s115
      %p121 = scmp.eq.s32.totalorder %s24, 0
      %p122 = por %p120, %p121
      %p123 = scmp.ne.s32.totalorder %s112, %s115
      %p124 = scmp.eq.s32.totalorder %s29, 1
      %p125 = por %p123, %p124
      %p126 = scmp.ne.s32.totalorder %s115, %s116
      %p127 = scmp.eq.s32.totalorder %s29, 0
      %p128 = por %p126, %p127
      %p129 = scmp.ne.s32.totalorder %s115, %s116
      %p130 = scmp.eq.s32.totalorder %s30, 1
      %p131 = por %p129, %p130
      %p133 = scmp.ne.s32.totalorder %s116, %s132
      %p134 = scmp.eq.s32.totalorder %s30, 0
      %p135 = por %p133, %p134
      %s136 = ssub.s32 %s24, %s31
      %p137 = scmp.eq.s32.totalorder %s136, 0
      %s139 = sadd.s32 %s138, 1
      %s140 = scalar_select %p137, %s138, %s139
      %p143 = pneg %p137
      %p144 = scmp.eq.s32.totalorder %s24, 1
      %p145 = por %p143, %p144
      %p146 = scmp.ne.s32.totalorder %s138, %s141
      %p147 = scmp.eq.s32.totalorder %s24, 0
      %p148 = por %p146, %p147
      %p149 = scmp.ne.s32.totalorder %s138, %s141
      %p150 = scmp.eq.s32.totalorder %s29, 1
      %p151 = por %p149, %p150
      %p152 = scmp.ne.s32.totalorder %s141, %s142
      %p153 = scmp.eq.s32.totalorder %s29, 0
      %p154 = por %p152, %p153
      %p155 = scmp.ne.s32.totalorder %s141, %s142
      %p156 = scmp.eq.s32.totalorder %s30, 1
      %p157 = por %p155, %p156
      %p159 = scmp.ne.s32.totalorder %s142, %s158
      %p160 = scmp.eq.s32.totalorder %s30, 0
      %p161 = por %p159, %p160
      %s162 = ssub.s32 %s24, %s31
      %p163 = scmp.eq.s32.totalorder %s162, 0
      %s165 = sadd.s32 %s164, 1
      %s166 = scalar_select %p163, %s164, %s165
      %p169 = pneg %p163
      %p170 = scmp.eq.s32.totalorder %s24, 1
      %p171 = por %p169, %p170
      %p172 = scmp.ne.s32.totalorder %s164, %s167
      %p173 = scmp.eq.s32.totalorder %s24, 0
      %p174 = por %p172, %p173
      %p175 = scmp.ne.s32.totalorder %s164, %s167
      %p176 = scmp.eq.s32.totalorder %s29, 1
      %p177 = por %p175, %p176
      %p178 = scmp.ne.s32.totalorder %s167, %s168
      %p179 = scmp.eq.s32.totalorder %s29, 0
      %p180 = por %p178, %p179
      %p181 = scmp.ne.s32.totalorder %s167, %s168
      %p182 = scmp.eq.s32.totalorder %s30, 1
      %p183 = por %p181, %p182
      %p185 = scmp.ne.s32.totalorder %s168, %s184
      %p186 = scmp.eq.s32.totalorder %s30, 0
      %p187 = por %p185, %p186
      %p188 = scmp.le.s32.totalorder 1, %s24
      %p189 = scmp.lt.s32.totalorder %s24, 3
      %p190 = pnand %p188, %p189
      %p191 = pneg %p190
      // Predicated region
      $region9: #{graph_appnp.1} parent=5 // pred_check
        _
      $region10: #{graph_appnp.1} parent=5 // pred_check_branch
        %193 = sbr.rel (%p190) target = $region12
      $region11: #{graph_appnp.1} parent=5 // pred_region
        %s194 = ssub.s32 %s24, 1
      $region12: #{graph_appnp.1} parent=5 // pred_fallthru
        _
      %p195 = scmp.lt.s32.totalorder %s24, 2
      // Predicated region
      $region13: #{graph_appnp.1} parent=5 // pred_check
        %p196 = pneg %p195
      $region14: #{graph_appnp.1} parent=5 // pred_check_branch
        %198 = sbr.rel (%p196) target = $region16
      $region15: #{graph_appnp.1} parent=5 // pred_region
        // Predicated region
        $region17: #{graph_appnp.1} parent=15 // pred_check
          %p199 = pneg %p44
        $region18: #{graph_appnp.1} parent=15 // pred_check_branch
          %201 = sbr.rel (%p199) target = $region20
        $region19: #{graph_appnp.1} parent=15 // pred_region
          %s202 = sand.u32 %s34, 1
          %s203 = scalar_lea.sflag [#allocation3], %s202
          %s204 = sand.u32 %s34, 1
          %s205 = smul.addr %s204, 40
          %s206 = scalar_lea.vmem [#allocation2], %s205
          %s207 = smul.u32 5, %s24
          %s208 = ssub.s32 9, %s207
          %p209 = scmp.lt.s32.totalorder %s208, 5
          %s210 = scalar_select %p209, %s208, 5
          %s211 = smul.u32 128, %s210
          %s213 = ssub.s32 640, %s211
          %214 = vsyncadd %s203, %s213
          %p215 = scmp.ne.s32.totalorder 0, %s211
          %s216 = smul.addr %s207, 128
          %s217 = scalar_lea.hbm %s0, %s216
          %s218 = smul.u32 8, %s210
          %s219 = sshll.u32 %s206, 4
          %s220 = int_to_ptr.vmem [resolvable:$true] %s219
          %s221 = sshll.u32 %s218, 4
          %225 = dma.hbm_to_vmem [thread:$0]  (%p215), %s217, %s221, %s220, %s203, 128, 128, 8
        $region20: #{graph_appnp.1} parent=15 // pred_fallthru
          _
        // Predicated region
        $region21: #{graph_appnp.1} parent=15 // pred_check
          %p226 = pneg %p70
        $region22: #{graph_appnp.1} parent=15 // pred_check_branch
          %228 = sbr.rel (%p226) target = $region24
        $region23: #{graph_appnp.1} parent=15 // pred_region
          %s229 = sand.u32 %s60, 1
          %s230 = scalar_lea.sflag [#allocation6], %s229
          %s231 = sand.u32 %s60, 1
          %s232 = smul.addr %s231, 320
          %s233 = scalar_lea.vmem [#allocation5], %s232
          %s234 = smul.u32 40, %s24
          %s235 = ssub.s32 72, %s234
          %p236 = scmp.lt.s32.totalorder %s235, 40
          %s237 = scalar_select %p236, %s235, 40
          %s238 = smul.u32 128, %s237
          %s240 = ssub.s32 5120, %s238
          %241 = vsyncadd %s230, %s240
          %p242 = scmp.ne.s32.totalorder 0, %s238
          %s243 = smul.addr %s234, 128
          %s244 = scalar_lea.hbm %s1, %s243
          %s245 = smul.u32 8, %s237
          %s246 = sshll.u32 %s233, 4
          %s247 = int_to_ptr.vmem [resolvable:$true] %s246
          %s248 = sshll.u32 %s245, 4
          %252 = dma.hbm_to_vmem [thread:$0]  (%p242), %s244, %s248, %s247, %s230, 128, 128, 8
        $region24: #{graph_appnp.1} parent=15 // pred_fallthru
          _
        // Predicated region
        $region25: #{graph_appnp.1} parent=15 // pred_check
          %p253 = pneg %p96
        $region26: #{graph_appnp.1} parent=15 // pred_check_branch
          %255 = sbr.rel (%p253) target = $region28
        $region27: #{graph_appnp.1} parent=15 // pred_region
          %s256 = smul.u32 5, %s24
          %s257 = ssub.s32 9, %s256
          %p258 = scmp.lt.s32.totalorder %s257, 5
          %s259 = scalar_select %p258, %s257, 5
          %s260 = smul.u32 128, %s259
          %p261 = scmp.lt.s32.totalorder %s256, 8
          %s262 = scalar_select %p261, %s256, 8
          %s263 = smul.addr %s262, 8
          %s264 = scalar_lea.vmem %s2, %s263
          %s265 = smul.u32 5, %s24
          %s266 = ssub.s32 9, %s265
          %p267 = scmp.lt.s32.totalorder %s266, 5
          %s268 = scalar_select %p267, %s266, 5
          %s269 = smul.u32 128, %s268
        $region28: #{graph_appnp.1} parent=15 // pred_fallthru
          _
        // Predicated region
        $region29: #{graph_appnp.1} parent=15 // pred_check
          %p270 = pneg %p122
        $region30: #{graph_appnp.1} parent=15 // pred_check_branch
          %272 = sbr.rel (%p270) target = $region32
        $region31: #{graph_appnp.1} parent=15 // pred_region
          %s273 = smul.u32 40, %s24
          %s274 = ssub.s32 72, %s273
          %p275 = scmp.lt.s32.totalorder %s274, 40
          %s276 = scalar_select %p275, %s274, 40
          %s277 = smul.u32 128, %s276
          %p278 = scmp.lt.s32.totalorder %s273, 71
          %s279 = scalar_select %p278, %s273, 71
          %s280 = smul.addr %s279, 8
          %s281 = scalar_lea.vmem %s3, %s280
          %s282 = smul.u32 40, %s24
          %s283 = ssub.s32 72, %s282
          %p284 = scmp.lt.s32.totalorder %s283, 40
          %s285 = scalar_select %p284, %s283, 40
          %s286 = smul.u32 128, %s285
        $region32: #{graph_appnp.1} parent=15 // pred_fallthru
          _
      $region16: #{graph_appnp.1} parent=5 // pred_fallthru
        _
      %p287 = scmp.le.s32.totalorder 1, %s24
      %p288 = scmp.lt.s32.totalorder %s24, 3
      %p289 = pnand %p287, %p288
      %p290 = pneg %p289
      // Predicated region
      $region33: #{graph_appnp.1} parent=5 // pred_check
        _
      $region34: #{graph_appnp.1} parent=5 // pred_check_branch
        %292 = sbr.rel (%p289) target = $region36
      $region35: #{graph_appnp.1} parent=5 // pred_region
        %s293 = ssub.s32 %s24, 1
        %s294 = sand.u32 %s37, 1
        %s295 = scalar_lea.sflag [#allocation3], %s294
        %s296 = sand.u32 %s37, 1
        %s297 = smul.addr %s296, 40
        %s298 = scalar_lea.vmem [#allocation2], %s297
        // Predicated region
        $region37: #{graph_appnp.1} parent=35 // pred_check
          %p299 = pneg %p50
        $region38: #{graph_appnp.1} parent=35 // pred_check_branch
          %301 = sbr.rel (%p299) target = $region40
        $region39: #{graph_appnp.1} parent=35 // pred_region
          %302 = dma.done %s295, 640
        $region40: #{graph_appnp.1} parent=35 // pred_fallthru
          _
        %s303 = sand.u32 %s63, 1
        %s304 = scalar_lea.sflag [#allocation6], %s303
        %s305 = sand.u32 %s63, 1
        %s306 = smul.addr %s305, 320
        %s307 = scalar_lea.vmem [#allocation5], %s306
        // Predicated region
        $region41: #{graph_appnp.1} parent=35 // pred_check
          %p308 = pneg %p76
        $region42: #{graph_appnp.1} parent=35 // pred_check_branch
          %310 = sbr.rel (%p308) target = $region44
        $region43: #{graph_appnp.1} parent=35 // pred_region
          %311 = dma.done %s304, 5120
        $region44: #{graph_appnp.1} parent=35 // pred_fallthru
          _
        %s312 = sand.u32 %s37, 1
        %s313 = scalar_lea.sflag [#allocation3], %s312
        %s314 = sand.u32 %s37, 1
        %s315 = smul.addr %s314, 40
        %s316 = scalar_lea.vmem [#allocation2], %s315
        %p317 = pneg %p50
        %p318 = pneg %p47
        %s319 = sand.u32 %s63, 1
        %s320 = scalar_lea.sflag [#allocation6], %s319
        %s321 = sand.u32 %s63, 1
        %s322 = smul.addr %s321, 320
        %s323 = scalar_lea.vmem [#allocation5], %s322
        %p324 = pneg %p76
        %p325 = pneg %p73
        %s326 = smul.u32 5, %s29
        %s327 = ssub.s32 9, %s326
        %p328 = scmp.lt.s32.totalorder %s327, 5
        %s329 = scalar_select %p328, %s327, 5
        %s330 = smul.u32 128, %s329
        %p331 = scmp.lt.s32.totalorder %s326, 8
        %s332 = scalar_select %p331, %s326, 8
        %s333 = smul.addr %s332, 8
        %s334 = scalar_lea.vmem %s2, %s333
        %p335 = pneg %p102
        %p336 = pneg %p99
        %s337 = smul.u32 40, %s29
        %s338 = ssub.s32 72, %s337
        %p339 = scmp.lt.s32.totalorder %s338, 40
        %s340 = scalar_select %p339, %s338, 40
        %s341 = smul.u32 128, %s340
        %p342 = scmp.lt.s32.totalorder %s337, 71
        %s343 = scalar_select %p342, %s337, 71
        %s344 = smul.addr %s343, 8
        %s345 = scalar_lea.vmem %s3, %s344
        %p346 = pneg %p128
        %p347 = pneg %p125
        %p348 = pneg %p154
        %p349 = pneg %p151
        %s350 = sand.u32 %s141, 1
        %s351 = scalar_lea.sflag [#allocation4], %s350
        %s352 = sand.u32 %s141, 1
        %s353 = smul.addr %s352, 40
        %s354 = scalar_lea.vmem [#allocation7], %s353
        %p355 = pneg %p180
        %p356 = pneg %p177
        %s357 = sand.u32 %s167, 1
        %s358 = scalar_lea.sflag [#allocation9], %s357
        %s359 = sand.u32 %s167, 1
        %s360 = smul.addr %s359, 320
        %s361 = scalar_lea.vmem [#allocation8], %s360
        %s362 = smul.u32 5, %s29
        %s363 = ssub.s32 9, %s362
        %p364 = scmp.lt.s32.totalorder %s363, 5
        %s365 = scalar_select %p364, %s363, 5
        %s366 = smul.u32 128, %s365
        %s367 = smul.u32 40, %s29
        %s368 = ssub.s32 72, %s367
        %p369 = scmp.lt.s32.totalorder %s368, 40
        %s370 = scalar_select %p369, %s368, 40
        %s371 = smul.u32 128, %s370
        %s372 = smul.u32 5, %s29
        %s373 = ssub.s32 9, %s372
        %p374 = scmp.lt.s32.totalorder %s373, 5
        %s375 = scalar_select %p374, %s373, 5
        %s376 = smul.u32 128, %s375
        %p377 = scmp.lt.s32.totalorder %s372, 8
        %s378 = scalar_select %p377, %s372, 8
        %s379 = smul.addr %s378, 8
        %s380 = scalar_lea.vmem %s2, %s379
        %s381 = smul.u32 5, %s29
        %s382 = ssub.s32 9, %s381
        %p383 = scmp.lt.s32.totalorder %s382, 5
        %s384 = scalar_select %p383, %s382, 5
        %s385 = smul.u32 128, %s384
        %s386 = smul.u32 40, %s29
        %s387 = ssub.s32 72, %s386
        %p388 = scmp.lt.s32.totalorder %s387, 40
        %s389 = scalar_select %p388, %s387, 40
        %s390 = smul.u32 128, %s389
        %p391 = scmp.lt.s32.totalorder %s386, 71
        %s392 = scalar_select %p391, %s386, 71
        %s393 = smul.addr %s392, 8
        %s394 = scalar_lea.vmem %s3, %s393
        %s395 = smul.u32 40, %s29
        %s396 = ssub.s32 72, %s395
        %p397 = scmp.lt.s32.totalorder %s396, 40
        %s398 = scalar_select %p397, %s396, 40
        %s399 = smul.u32 128, %s398
        %s400 = smul.u32 5, %s29
        %s401 = ssub.s32 9, %s400
        %p402 = scmp.lt.s32.totalorder %s401, 5
        %s403 = scalar_select %p402, %s401, 5
        %s404 = smul.u32 128, %s403
        %s405 = smul.u32 40, %s29
        %s406 = ssub.s32 72, %s405
        %p407 = scmp.lt.s32.totalorder %s406, 40
        %s408 = scalar_select %p407, %s406, 40
        %s409 = smul.u32 128, %s408
        %v410 = vld [vmem:[%s298] sm:$0xff]
        %v411 = vld [vmem:[%s298 + $0x8] sm:$0xff]
        %v412 = vld [vmem:[%s298 + $0x10] sm:$0xff]
        %v413 = vld [vmem:[%s298 + $0x18] sm:$0xff]
        %v414 = vld [vmem:[%s298 + $0x20] sm:$0xff]
        %v415 = vld [vmem:[%s307] sm:$0xff]
        %v416 = vld [vmem:[%s307 + $0x8] sm:$0xff]
        %v417 = vld [vmem:[%s307 + $0x10] sm:$0xff]
        %v418 = vld [vmem:[%s307 + $0x18] sm:$0xff]
        %v419 = vld [vmem:[%s307 + $0x20] sm:$0xff]
        %v420 = vld [vmem:[%s307 + $0x28] sm:$0xff]
        %v421 = vld [vmem:[%s307 + $0x30] sm:$0xff]
        %v422 = vld [vmem:[%s307 + $0x38] sm:$0xff]
        %v423 = vld [vmem:[%s307 + $0x40] sm:$0xff]
        %v424 = vld [vmem:[%s307 + $0x48] sm:$0xff]
        %v425 = vld [vmem:[%s307 + $0x50] sm:$0xff]
        %v426 = vld [vmem:[%s307 + $0x58] sm:$0xff]
        %v427 = vld [vmem:[%s307 + $0x60] sm:$0xff]
        %v428 = vld [vmem:[%s307 + $0x68] sm:$0xff]
        %v429 = vld [vmem:[%s307 + $0x70] sm:$0xff]
        %v430 = vld [vmem:[%s307 + $0x78] sm:$0xff]
        %v431 = vld [vmem:[%s307 + $0x80] sm:$0xff]
        %v432 = vld [vmem:[%s307 + $0x88] sm:$0xff]
        %v433 = vld [vmem:[%s307 + $0x90] sm:$0xff]
        %v434 = vld [vmem:[%s307 + $0x98] sm:$0xff]
        %v435 = vld [vmem:[%s307 + $0xa0] sm:$0xff]
        %v436 = vld [vmem:[%s307 + $0xa8] sm:$0xff]
        %v437 = vld [vmem:[%s307 + $0xb0] sm:$0xff]
        %v438 = vld [vmem:[%s307 + $0xb8] sm:$0xff]
        %v439 = vld [vmem:[%s307 + $0xc0] sm:$0xff]
        %v440 = vld [vmem:[%s307 + $0xc8] sm:$0xff]
        %v441 = vld [vmem:[%s307 + $0xd0] sm:$0xff]
        %v442 = vld [vmem:[%s307 + $0xd8] sm:$0xff]
        %v443 = vld [vmem:[%s307 + $0xe0] sm:$0xff]
        %v444 = vld [vmem:[%s307 + $0xe8] sm:$0xff]
        %v445 = vld [vmem:[%s307 + $0xf0] sm:$0xff]
        %v446 = vld [vmem:[%s307 + $0xf8] sm:$0xff]
        %v447 = vld [vmem:[%s307 + $0x100] sm:$0xff]
        %v448 = vld [vmem:[%s307 + $0x108] sm:$0xff]
        %v449 = vld [vmem:[%s307 + $0x110] sm:$0xff]
        %v450 = vld [vmem:[%s307 + $0x118] sm:$0xff]
        %v451 = vld [vmem:[%s307 + $0x120] sm:$0xff]
        %v452 = vld [vmem:[%s307 + $0x128] sm:$0xff]
        %v453 = vld [vmem:[%s307 + $0x130] sm:$0xff]
        %v454 = vld [vmem:[%s307 + $0x138] sm:$0xff]
        %v455 = vrot.slane %v415, 4
        %v456 = vadd.f32 %v415, %v455
        %v457 = vrot.slane %v456, 2
        %v458 = vadd.f32 %v456, %v457
        %v459 = vrot.slane %v458, 1
        %v460 = vadd.f32 %v458, %v459
        %v461 = vrot.slane %v416, 4
        %v462 = vadd.f32 %v416, %v461
        %v463 = vrot.slane %v462, 2
        %v464 = vadd.f32 %v462, %v463
        %v465 = vrot.slane %v464, 1
        %v466 = vadd.f32 %v464, %v465
        %v467 = vrot.slane %v417, 4
        %v468 = vadd.f32 %v417, %v467
        %v469 = vrot.slane %v468, 2
        %v470 = vadd.f32 %v468, %v469
        %v471 = vrot.slane %v470, 1
        %v472 = vadd.f32 %v470, %v471
        %v473 = vrot.slane %v418, 4
        %v474 = vadd.f32 %v418, %v473
        %v475 = vrot.slane %v474, 2
        %v476 = vadd.f32 %v474, %v475
        %v477 = vrot.slane %v476, 1
        %v478 = vadd.f32 %v476, %v477
        %v479 = vrot.slane %v419, 4
        %v480 = vadd.f32 %v419, %v479
        %v481 = vrot.slane %v480, 2
        %v482 = vadd.f32 %v480, %v481
        %v483 = vrot.slane %v482, 1
        %v484 = vadd.f32 %v482, %v483
        %v485 = vrot.slane %v420, 4
        %v486 = vadd.f32 %v420, %v485
        %v487 = vrot.slane %v486, 2
        %v488 = vadd.f32 %v486, %v487
        %v489 = vrot.slane %v488, 1
        %v490 = vadd.f32 %v488, %v489
        %v491 = vrot.slane %v421, 4
        %v492 = vadd.f32 %v421, %v491
        %v493 = vrot.slane %v492, 2
        %v494 = vadd.f32 %v492, %v493
        %v495 = vrot.slane %v494, 1
        %v496 = vadd.f32 %v494, %v495
        %v497 = vrot.slane %v422, 4
        %v498 = vadd.f32 %v422, %v497
        %v499 = vrot.slane %v498, 2
        %v500 = vadd.f32 %v498, %v499
        %v501 = vrot.slane %v500, 1
        %v502 = vadd.f32 %v500, %v501
        %v503 = vrot.slane %v423, 4
        %v504 = vadd.f32 %v423, %v503
        %v505 = vrot.slane %v504, 2
        %v506 = vadd.f32 %v504, %v505
        %v507 = vrot.slane %v506, 1
        %v508 = vadd.f32 %v506, %v507
        %v509 = vrot.slane %v424, 4
        %v510 = vadd.f32 %v424, %v509
        %v511 = vrot.slane %v510, 2
        %v512 = vadd.f32 %v510, %v511
        %v513 = vrot.slane %v512, 1
        %v514 = vadd.f32 %v512, %v513
        %v515 = vrot.slane %v425, 4
        %v516 = vadd.f32 %v425, %v515
        %v517 = vrot.slane %v516, 2
        %v518 = vadd.f32 %v516, %v517
        %v519 = vrot.slane %v518, 1
        %v520 = vadd.f32 %v518, %v519
        %v521 = vrot.slane %v426, 4
        %v522 = vadd.f32 %v426, %v521
        %v523 = vrot.slane %v522, 2
        %v524 = vadd.f32 %v522, %v523
        %v525 = vrot.slane %v524, 1
        %v526 = vadd.f32 %v524, %v525
        %v527 = vrot.slane %v427, 4
        %v528 = vadd.f32 %v427, %v527
        %v529 = vrot.slane %v528, 2
        %v530 = vadd.f32 %v528, %v529
        %v531 = vrot.slane %v530, 1
        %v532 = vadd.f32 %v530, %v531
        %v533 = vrot.slane %v428, 4
        %v534 = vadd.f32 %v428, %v533
        %v535 = vrot.slane %v534, 2
        %v536 = vadd.f32 %v534, %v535
        %v537 = vrot.slane %v536, 1
        %v538 = vadd.f32 %v536, %v537
        %v539 = vrot.slane %v429, 4
        %v540 = vadd.f32 %v429, %v539
        %v541 = vrot.slane %v540, 2
        %v542 = vadd.f32 %v540, %v541
        %v543 = vrot.slane %v542, 1
        %v544 = vadd.f32 %v542, %v543
        %v545 = vrot.slane %v430, 4
        %v546 = vadd.f32 %v430, %v545
        %v547 = vrot.slane %v546, 2
        %v548 = vadd.f32 %v546, %v547
        %v549 = vrot.slane %v548, 1
        %v550 = vadd.f32 %v548, %v549
        %v551 = vrot.slane %v431, 4
        %v552 = vadd.f32 %v431, %v551
        %v553 = vrot.slane %v552, 2
        %v554 = vadd.f32 %v552, %v553
        %v555 = vrot.slane %v554, 1
        %v556 = vadd.f32 %v554, %v555
        %v557 = vrot.slane %v432, 4
        %v558 = vadd.f32 %v432, %v557
        %v559 = vrot.slane %v558, 2
        %v560 = vadd.f32 %v558, %v559
        %v561 = vrot.slane %v560, 1
        %v562 = vadd.f32 %v560, %v561
        %v563 = vrot.slane %v433, 4
        %v564 = vadd.f32 %v433, %v563
        %v565 = vrot.slane %v564, 2
        %v566 = vadd.f32 %v564, %v565
        %v567 = vrot.slane %v566, 1
        %v568 = vadd.f32 %v566, %v567
        %v569 = vrot.slane %v434, 4
        %v570 = vadd.f32 %v434, %v569
        %v571 = vrot.slane %v570, 2
        %v572 = vadd.f32 %v570, %v571
        %v573 = vrot.slane %v572, 1
        %v574 = vadd.f32 %v572, %v573
        %v575 = vrot.slane %v435, 4
        %v576 = vadd.f32 %v435, %v575
        %v577 = vrot.slane %v576, 2
        %v578 = vadd.f32 %v576, %v577
        %v579 = vrot.slane %v578, 1
        %v580 = vadd.f32 %v578, %v579
        %v581 = vrot.slane %v436, 4
        %v582 = vadd.f32 %v436, %v581
        %v583 = vrot.slane %v582, 2
        %v584 = vadd.f32 %v582, %v583
        %v585 = vrot.slane %v584, 1
        %v586 = vadd.f32 %v584, %v585
        %v587 = vrot.slane %v437, 4
        %v588 = vadd.f32 %v437, %v587
        %v589 = vrot.slane %v588, 2
        %v590 = vadd.f32 %v588, %v589
        %v591 = vrot.slane %v590, 1
        %v592 = vadd.f32 %v590, %v591
        %v593 = vrot.slane %v438, 4
        %v594 = vadd.f32 %v438, %v593
        %v595 = vrot.slane %v594, 2
        %v596 = vadd.f32 %v594, %v595
        %v597 = vrot.slane %v596, 1
        %v598 = vadd.f32 %v596, %v597
        %v599 = vrot.slane %v439, 4
        %v600 = vadd.f32 %v439, %v599
        %v601 = vrot.slane %v600, 2
        %v602 = vadd.f32 %v600, %v601
        %v603 = vrot.slane %v602, 1
        %v604 = vadd.f32 %v602, %v603
        %v605 = vrot.slane %v440, 4
        %v606 = vadd.f32 %v440, %v605
        %v607 = vrot.slane %v606, 2
        %v608 = vadd.f32 %v606, %v607
        %v609 = vrot.slane %v608, 1
        %v610 = vadd.f32 %v608, %v609
        %v611 = vrot.slane %v441, 4
        %v612 = vadd.f32 %v441, %v611
        %v613 = vrot.slane %v612, 2
        %v614 = vadd.f32 %v612, %v613
        %v615 = vrot.slane %v614, 1
        %v616 = vadd.f32 %v614, %v615
        %v617 = vrot.slane %v442, 4
        %v618 = vadd.f32 %v442, %v617
        %v619 = vrot.slane %v618, 2
        %v620 = vadd.f32 %v618, %v619
        %v621 = vrot.slane %v620, 1
        %v622 = vadd.f32 %v620, %v621
        %v623 = vrot.slane %v443, 4
        %v624 = vadd.f32 %v443, %v623
        %v625 = vrot.slane %v624, 2
        %v626 = vadd.f32 %v624, %v625
        %v627 = vrot.slane %v626, 1
        %v628 = vadd.f32 %v626, %v627
        %v629 = vrot.slane %v444, 4
        %v630 = vadd.f32 %v444, %v629
        %v631 = vrot.slane %v630, 2
        %v632 = vadd.f32 %v630, %v631
        %v633 = vrot.slane %v632, 1
        %v634 = vadd.f32 %v632, %v633
        %v635 = vrot.slane %v445, 4
        %v636 = vadd.f32 %v445, %v635
        %v637 = vrot.slane %v636, 2
        %v638 = vadd.f32 %v636, %v637
        %v639 = vrot.slane %v638, 1
        %v640 = vadd.f32 %v638, %v639
        %v641 = vrot.slane %v446, 4
        %v642 = vadd.f32 %v446, %v641
        %v643 = vrot.slane %v642, 2
        %v644 = vadd.f32 %v642, %v643
        %v645 = vrot.slane %v644, 1
        %v646 = vadd.f32 %v644, %v645
        %v647 = vrot.slane %v447, 4
        %v648 = vadd.f32 %v447, %v647
        %v649 = vrot.slane %v648, 2
        %v650 = vadd.f32 %v648, %v649
        %v651 = vrot.slane %v650, 1
        %v652 = vadd.f32 %v650, %v651
        %v653 = vrot.slane %v448, 4
        %v654 = vadd.f32 %v448, %v653
        %v655 = vrot.slane %v654, 2
        %v656 = vadd.f32 %v654, %v655
        %v657 = vrot.slane %v656, 1
        %v658 = vadd.f32 %v656, %v657
        %v659 = vrot.slane %v449, 4
        %v660 = vadd.f32 %v449, %v659
        %v661 = vrot.slane %v660, 2
        %v662 = vadd.f32 %v660, %v661
        %v663 = vrot.slane %v662, 1
        %v664 = vadd.f32 %v662, %v663
        %v665 = vrot.slane %v450, 4
        %v666 = vadd.f32 %v450, %v665
        %v667 = vrot.slane %v666, 2
        %v668 = vadd.f32 %v666, %v667
        %v669 = vrot.slane %v668, 1
        %v670 = vadd.f32 %v668, %v669
        %v671 = vrot.slane %v451, 4
        %v672 = vadd.f32 %v451, %v671
        %v673 = vrot.slane %v672, 2
        %v674 = vadd.f32 %v672, %v673
        %v675 = vrot.slane %v674, 1
        %v676 = vadd.f32 %v674, %v675
        %v677 = vrot.slane %v452, 4
        %v678 = vadd.f32 %v452, %v677
        %v679 = vrot.slane %v678, 2
        %v680 = vadd.f32 %v678, %v679
        %v681 = vrot.slane %v680, 1
        %v682 = vadd.f32 %v680, %v681
        %v683 = vrot.slane %v453, 4
        %v684 = vadd.f32 %v453, %v683
        %v685 = vrot.slane %v684, 2
        %v686 = vadd.f32 %v684, %v685
        %v687 = vrot.slane %v686, 1
        %v688 = vadd.f32 %v686, %v687
        %v689 = vrot.slane %v454, 4
        %v690 = vadd.f32 %v454, %v689
        %v691 = vrot.slane %v690, 2
        %v692 = vadd.f32 %v690, %v691
        %v693 = vrot.slane %v692, 1
        %v694 = vadd.f32 %v692, %v693
        %vm735 = vcmask 1041409
        %v736 = vsel %vm735, %v466, %v460
        %vm737 = vcmask 1042434
        %v738 = vsel %vm737, %v472, %v736
        %vm739 = vcmask 1043459
        %v740 = vsel %vm739, %v478, %v738
        %vm741 = vcmask 1044484
        %v742 = vsel %vm741, %v484, %v740
        %vm743 = vcmask 1045509
        %v744 = vsel %vm743, %v490, %v742
        %vm745 = vcmask 1046534
        %v746 = vsel %vm745, %v496, %v744
        %vm747 = vcmask 1047559
        %v748 = vsel %vm747, %v502, %v746
        %v749 = vsel %vm735, %v514, %v508
        %v750 = vsel %vm737, %v520, %v749
        %v751 = vsel %vm739, %v526, %v750
        %v752 = vsel %vm741, %v532, %v751
        %v753 = vsel %vm743, %v538, %v752
        %v754 = vsel %vm745, %v544, %v753
        %v755 = vsel %vm747, %v550, %v754
        %v756 = vsel %vm735, %v562, %v556
        %v757 = vsel %vm737, %v568, %v756
        %v758 = vsel %vm739, %v574, %v757
        %v759 = vsel %vm741, %v580, %v758
        %v760 = vsel %vm743, %v586, %v759
        %v761 = vsel %vm745, %v592, %v760
        %v762 = vsel %vm747, %v598, %v761
        %v763 = vsel %vm735, %v610, %v604
        %v764 = vsel %vm737, %v616, %v763
        %v765 = vsel %vm739, %v622, %v764
        %v766 = vsel %vm741, %v628, %v765
        %v767 = vsel %vm743, %v634, %v766
        %v768 = vsel %vm745, %v640, %v767
        %v769 = vsel %vm747, %v646, %v768
        %v770 = vsel %vm735, %v658, %v652
        %v771 = vsel %vm737, %v664, %v770
        %v772 = vsel %vm739, %v670, %v771
        %v773 = vsel %vm741, %v676, %v772
        %v774 = vsel %vm743, %v682, %v773
        %v775 = vsel %vm745, %v688, %v774
        %v776 = vsel %vm747, %v694, %v775
        %v782 = vadd.f32 %v410, %v748
        %v783 = vadd.f32 %v411, %v755
        %v784 = vadd.f32 %v412, %v762
        %v785 = vadd.f32 %v413, %v769
        %v786 = vadd.f32 %v414, %v776
        %v787 = vmul.f32 %v782, 0.9
        %v788 = vmul.f32 %v783, 0.9
        %v789 = vmul.f32 %v784, 0.9
        %v790 = vmul.f32 %v785, 0.9
        %v791 = vmul.f32 %v786, 0.9
        %v792 = vld [vmem:[%s380] sm:$0xff]
        %v793 = vld [vmem:[%s380 + $0x8] sm:$0xff]
        %v794 = vld [vmem:[%s380 + $0x10] sm:$0xff]
        %v795 = vld [vmem:[%s380 + $0x18] sm:$0xff]
        %v796 = vld [vmem:[%s380 + $0x20] sm:$0xff]
        %v797 = vmul.f32 %v792, 0.1
        %v798 = vmul.f32 %v793, 0.1
        %v799 = vmul.f32 %v794, 0.1
        %v800 = vmul.f32 %v795, 0.1
        %v801 = vmul.f32 %v796, 0.1
        %v802 = vadd.f32 %v787, %v797
        %v803 = vadd.f32 %v788, %v798
        %v804 = vadd.f32 %v789, %v799
        %v805 = vadd.f32 %v790, %v800
        %v806 = vadd.f32 %v791, %v801
        %807 = vst [vmem:[%s354] sm:$0xff] %v802
        %808 = vst [vmem:[%s354 + $0x8] sm:$0xff] %v803
        %809 = vst [vmem:[%s354 + $0x10] sm:$0xff] %v804
        %810 = vst [vmem:[%s354 + $0x18] sm:$0xff] %v805
        %811 = vst [vmem:[%s354 + $0x20] sm:$0xff] %v806
        %v817 = vcombine.high %v410, %v410
        %v819 = vunpack.c.l.s4 1966171168
        %v820 = vunpack.c.0.s8 %v819
        %v821 = vlaneseq
        %v822 = vshrl.u32 %v821, 7
        %v823 = vsub.s32 %v820, %v822
        %v824 = vrot.slane %v410, %v823
        %v826 = vunpack.c.l.s4 1966171168
        %v827 = vunpack.c.0.s8 %v826
        %v828 = vlaneseq
        %v829 = vshrl.u32 %v828, 7
        %v830 = vsub.s32 %v827, %v829
        %v831 = vrot.slane %v817, %v830
        %v832 = vcombine.high %v824, %v824
        %v833 = vcombine.high %v831, %v831
        %v835 = vunpack.c.l.s4 1966171168
        %v836 = vunpack.c.0.s8 %v835
        %v837 = vlaneseq
        %v838 = vshrl.u32 %v837, 7
        %v839 = vsub.s32 %v836, %v838
        %v840 = vrot.slane %v824, %v839
        %v842 = vunpack.c.l.s4 1966171168
        %v843 = vunpack.c.0.s8 %v842
        %v844 = vlaneseq
        %v845 = vshrl.u32 %v844, 7
        %v846 = vsub.s32 %v843, %v845
        %v847 = vrot.slane %v831, %v846
        %v849 = vunpack.c.l.s4 1966171168
        %v850 = vunpack.c.0.s8 %v849
        %v851 = vlaneseq
        %v852 = vshrl.u32 %v851, 7
        %v853 = vsub.s32 %v850, %v852
        %v854 = vrot.slane %v832, %v853
        %v856 = vunpack.c.l.s4 1966171168
        %v857 = vunpack.c.0.s8 %v856
        %v858 = vlaneseq
        %v859 = vshrl.u32 %v858, 7
        %v860 = vsub.s32 %v857, %v859
        %v861 = vrot.slane %v833, %v860
        %v862 = vcombine.high %v840, %v840
        %v863 = vcombine.high %v847, %v847
        %v864 = vcombine.high %v854, %v854
        %v865 = vcombine.high %v861, %v861
        %v866 = vcombine.high %v411, %v411
        %v868 = vunpack.c.l.s4 1966171168
        %v869 = vunpack.c.0.s8 %v868
        %v870 = vlaneseq
        %v871 = vshrl.u32 %v870, 7
        %v872 = vsub.s32 %v869, %v871
        %v873 = vrot.slane %v411, %v872
        %v875 = vunpack.c.l.s4 1966171168
        %v876 = vunpack.c.0.s8 %v875
        %v877 = vlaneseq
        %v878 = vshrl.u32 %v877, 7
        %v879 = vsub.s32 %v876, %v878
        %v880 = vrot.slane %v866, %v879
        %v881 = vcombine.high %v873, %v873
        %v882 = vcombine.high %v880, %v880
        %v884 = vunpack.c.l.s4 1966171168
        %v885 = vunpack.c.0.s8 %v884
        %v886 = vlaneseq
        %v887 = vshrl.u32 %v886, 7
        %v888 = vsub.s32 %v885, %v887
        %v889 = vrot.slane %v873, %v888
        %v891 = vunpack.c.l.s4 1966171168
        %v892 = vunpack.c.0.s8 %v891
        %v893 = vlaneseq
        %v894 = vshrl.u32 %v893, 7
        %v895 = vsub.s32 %v892, %v894
        %v896 = vrot.slane %v880, %v895
        %v898 = vunpack.c.l.s4 1966171168
        %v899 = vunpack.c.0.s8 %v898
        %v900 = vlaneseq
        %v901 = vshrl.u32 %v900, 7
        %v902 = vsub.s32 %v899, %v901
        %v903 = vrot.slane %v881, %v902
        %v905 = vunpack.c.l.s4 1966171168
        %v906 = vunpack.c.0.s8 %v905
        %v907 = vlaneseq
        %v908 = vshrl.u32 %v907, 7
        %v909 = vsub.s32 %v906, %v908
        %v910 = vrot.slane %v882, %v909
        %v911 = vcombine.high %v889, %v889
        %v912 = vcombine.high %v896, %v896
        %v913 = vcombine.high %v903, %v903
        %v914 = vcombine.high %v910, %v910
        %v915 = vcombine.high %v412, %v412
        %v917 = vunpack.c.l.s4 1966171168
        %v918 = vunpack.c.0.s8 %v917
        %v919 = vlaneseq
        %v920 = vshrl.u32 %v919, 7
        %v921 = vsub.s32 %v918, %v920
        %v922 = vrot.slane %v412, %v921
        %v924 = vunpack.c.l.s4 1966171168
        %v925 = vunpack.c.0.s8 %v924
        %v926 = vlaneseq
        %v927 = vshrl.u32 %v926, 7
        %v928 = vsub.s32 %v925, %v927
        %v929 = vrot.slane %v915, %v928
        %v930 = vcombine.high %v922, %v922
        %v931 = vcombine.high %v929, %v929
        %v933 = vunpack.c.l.s4 1966171168
        %v934 = vunpack.c.0.s8 %v933
        %v935 = vlaneseq
        %v936 = vshrl.u32 %v935, 7
        %v937 = vsub.s32 %v934, %v936
        %v938 = vrot.slane %v922, %v937
        %v940 = vunpack.c.l.s4 1966171168
        %v941 = vunpack.c.0.s8 %v940
        %v942 = vlaneseq
        %v943 = vshrl.u32 %v942, 7
        %v944 = vsub.s32 %v941, %v943
        %v945 = vrot.slane %v929, %v944
        %v947 = vunpack.c.l.s4 1966171168
        %v948 = vunpack.c.0.s8 %v947
        %v949 = vlaneseq
        %v950 = vshrl.u32 %v949, 7
        %v951 = vsub.s32 %v948, %v950
        %v952 = vrot.slane %v930, %v951
        %v954 = vunpack.c.l.s4 1966171168
        %v955 = vunpack.c.0.s8 %v954
        %v956 = vlaneseq
        %v957 = vshrl.u32 %v956, 7
        %v958 = vsub.s32 %v955, %v957
        %v959 = vrot.slane %v931, %v958
        %v960 = vcombine.high %v938, %v938
        %v961 = vcombine.high %v945, %v945
        %v962 = vcombine.high %v952, %v952
        %v963 = vcombine.high %v959, %v959
        %v964 = vcombine.high %v413, %v413
        %v966 = vunpack.c.l.s4 1966171168
        %v967 = vunpack.c.0.s8 %v966
        %v968 = vlaneseq
        %v969 = vshrl.u32 %v968, 7
        %v970 = vsub.s32 %v967, %v969
        %v971 = vrot.slane %v413, %v970
        %v973 = vunpack.c.l.s4 1966171168
        %v974 = vunpack.c.0.s8 %v973
        %v975 = vlaneseq
        %v976 = vshrl.u32 %v975, 7
        %v977 = vsub.s32 %v974, %v976
        %v978 = vrot.slane %v964, %v977
        %v979 = vcombine.high %v971, %v971
        %v980 = vcombine.high %v978, %v978
        %v982 = vunpack.c.l.s4 1966171168
        %v983 = vunpack.c.0.s8 %v982
        %v984 = vlaneseq
        %v985 = vshrl.u32 %v984, 7
        %v986 = vsub.s32 %v983, %v985
        %v987 = vrot.slane %v971, %v986
        %v989 = vunpack.c.l.s4 1966171168
        %v990 = vunpack.c.0.s8 %v989
        %v991 = vlaneseq
        %v992 = vshrl.u32 %v991, 7
        %v993 = vsub.s32 %v990, %v992
        %v994 = vrot.slane %v978, %v993
        %v996 = vunpack.c.l.s4 1966171168
        %v997 = vunpack.c.0.s8 %v996
        %v998 = vlaneseq
        %v999 = vshrl.u32 %v998, 7
        %v1000 = vsub.s32 %v997, %v999
        %v1001 = vrot.slane %v979, %v1000
        %v1003 = vunpack.c.l.s4 1966171168
        %v1004 = vunpack.c.0.s8 %v1003
        %v1005 = vlaneseq
        %v1006 = vshrl.u32 %v1005, 7
        %v1007 = vsub.s32 %v1004, %v1006
        %v1008 = vrot.slane %v980, %v1007
        %v1009 = vcombine.high %v987, %v987
        %v1010 = vcombine.high %v994, %v994
        %v1011 = vcombine.high %v1001, %v1001
        %v1012 = vcombine.high %v1008, %v1008
        %v1013 = vcombine.high %v414, %v414
        %v1015 = vunpack.c.l.s4 1966171168
        %v1016 = vunpack.c.0.s8 %v1015
        %v1017 = vlaneseq
        %v1018 = vshrl.u32 %v1017, 7
        %v1019 = vsub.s32 %v1016, %v1018
        %v1020 = vrot.slane %v414, %v1019
        %v1022 = vunpack.c.l.s4 1966171168
        %v1023 = vunpack.c.0.s8 %v1022
        %v1024 = vlaneseq
        %v1025 = vshrl.u32 %v1024, 7
        %v1026 = vsub.s32 %v1023, %v1025
        %v1027 = vrot.slane %v1013, %v1026
        %v1028 = vcombine.high %v1020, %v1020
        %v1029 = vcombine.high %v1027, %v1027
        %v1031 = vunpack.c.l.s4 1966171168
        %v1032 = vunpack.c.0.s8 %v1031
        %v1033 = vlaneseq
        %v1034 = vshrl.u32 %v1033, 7
        %v1035 = vsub.s32 %v1032, %v1034
        %v1036 = vrot.slane %v1020, %v1035
        %v1038 = vunpack.c.l.s4 1966171168
        %v1039 = vunpack.c.0.s8 %v1038
        %v1040 = vlaneseq
        %v1041 = vshrl.u32 %v1040, 7
        %v1042 = vsub.s32 %v1039, %v1041
        %v1043 = vrot.slane %v1027, %v1042
        %v1045 = vunpack.c.l.s4 1966171168
        %v1046 = vunpack.c.0.s8 %v1045
        %v1047 = vlaneseq
        %v1048 = vshrl.u32 %v1047, 7
        %v1049 = vsub.s32 %v1046, %v1048
        %v1050 = vrot.slane %v1028, %v1049
        %v1052 = vunpack.c.l.s4 1966171168
        %v1053 = vunpack.c.0.s8 %v1052
        %v1054 = vlaneseq
        %v1055 = vshrl.u32 %v1054, 7
        %v1056 = vsub.s32 %v1053, %v1055
        %v1057 = vrot.slane %v1029, %v1056
        %v1058 = vcombine.high %v1036, %v1036
        %v1059 = vcombine.high %v1043, %v1043
        %v1060 = vcombine.high %v1050, %v1050
        %v1061 = vcombine.high %v1057, %v1057
        %v1062 = vlaneseq
        %v1063 = vshrl.u32 %v1062, 7
        %v1064 = vsub.s32 0, %v1063
        %v1065 = vrot.slane %v840, %v1064
        %v1066 = vlaneseq
        %v1067 = vshrl.u32 %v1066, 7
        %v1068 = vsub.s32 0, %v1067
        %v1069 = vrot.slane %v854, %v1068
        %v1070 = vlaneseq
        %v1071 = vshrl.u32 %v1070, 7
        %v1072 = vsub.s32 0, %v1071
        %v1073 = vrot.slane %v862, %v1072
        %v1074 = vlaneseq
        %v1075 = vshrl.u32 %v1074, 7
        %v1076 = vsub.s32 0, %v1075
        %v1077 = vrot.slane %v864, %v1076
        %v1078 = vlaneseq
        %v1079 = vshrl.u32 %v1078, 7
        %v1080 = vsub.s32 0, %v1079
        %v1081 = vrot.slane %v847, %v1080
        %v1082 = vlaneseq
        %v1083 = vshrl.u32 %v1082, 7
        %v1084 = vsub.s32 0, %v1083
        %v1085 = vrot.slane %v861, %v1084
        %v1086 = vlaneseq
        %v1087 = vshrl.u32 %v1086, 7
        %v1088 = vsub.s32 0, %v1087
        %v1089 = vrot.slane %v863, %v1088
        %v1090 = vlaneseq
        %v1091 = vshrl.u32 %v1090, 7
        %v1092 = vsub.s32 0, %v1091
        %v1093 = vrot.slane %v865, %v1092
        %v1094 = vlaneseq
        %v1095 = vshrl.u32 %v1094, 7
        %v1096 = vsub.s32 0, %v1095
        %v1097 = vrot.slane %v889, %v1096
        %v1098 = vlaneseq
        %v1099 = vshrl.u32 %v1098, 7
        %v1100 = vsub.s32 0, %v1099
        %v1101 = vrot.slane %v903, %v1100
        %v1102 = vlaneseq
        %v1103 = vshrl.u32 %v1102, 7
        %v1104 = vsub.s32 0, %v1103
        %v1105 = vrot.slane %v911, %v1104
        %v1106 = vlaneseq
        %v1107 = vshrl.u32 %v1106, 7
        %v1108 = vsub.s32 0, %v1107
        %v1109 = vrot.slane %v913, %v1108
        %v1110 = vlaneseq
        %v1111 = vshrl.u32 %v1110, 7
        %v1112 = vsub.s32 0, %v1111
        %v1113 = vrot.slane %v896, %v1112
        %v1114 = vlaneseq
        %v1115 = vshrl.u32 %v1114, 7
        %v1116 = vsub.s32 0, %v1115
        %v1117 = vrot.slane %v910, %v1116
        %v1118 = vlaneseq
        %v1119 = vshrl.u32 %v1118, 7
        %v1120 = vsub.s32 0, %v1119
        %v1121 = vrot.slane %v912, %v1120
        %v1122 = vlaneseq
        %v1123 = vshrl.u32 %v1122, 7
        %v1124 = vsub.s32 0, %v1123
        %v1125 = vrot.slane %v914, %v1124
        %v1126 = vlaneseq
        %v1127 = vshrl.u32 %v1126, 7
        %v1128 = vsub.s32 0, %v1127
        %v1129 = vrot.slane %v938, %v1128
        %v1130 = vlaneseq
        %v1131 = vshrl.u32 %v1130, 7
        %v1132 = vsub.s32 0, %v1131
        %v1133 = vrot.slane %v952, %v1132
        %v1134 = vlaneseq
        %v1135 = vshrl.u32 %v1134, 7
        %v1136 = vsub.s32 0, %v1135
        %v1137 = vrot.slane %v960, %v1136
        %v1138 = vlaneseq
        %v1139 = vshrl.u32 %v1138, 7
        %v1140 = vsub.s32 0, %v1139
        %v1141 = vrot.slane %v962, %v1140
        %v1142 = vlaneseq
        %v1143 = vshrl.u32 %v1142, 7
        %v1144 = vsub.s32 0, %v1143
        %v1145 = vrot.slane %v945, %v1144
        %v1146 = vlaneseq
        %v1147 = vshrl.u32 %v1146, 7
        %v1148 = vsub.s32 0, %v1147
        %v1149 = vrot.slane %v959, %v1148
        %v1150 = vlaneseq
        %v1151 = vshrl.u32 %v1150, 7
        %v1152 = vsub.s32 0, %v1151
        %v1153 = vrot.slane %v961, %v1152
        %v1154 = vlaneseq
        %v1155 = vshrl.u32 %v1154, 7
        %v1156 = vsub.s32 0, %v1155
        %v1157 = vrot.slane %v963, %v1156
        %v1158 = vlaneseq
        %v1159 = vshrl.u32 %v1158, 7
        %v1160 = vsub.s32 0, %v1159
        %v1161 = vrot.slane %v987, %v1160
        %v1162 = vlaneseq
        %v1163 = vshrl.u32 %v1162, 7
        %v1164 = vsub.s32 0, %v1163
        %v1165 = vrot.slane %v1001, %v1164
        %v1166 = vlaneseq
        %v1167 = vshrl.u32 %v1166, 7
        %v1168 = vsub.s32 0, %v1167
        %v1169 = vrot.slane %v1009, %v1168
        %v1170 = vlaneseq
        %v1171 = vshrl.u32 %v1170, 7
        %v1172 = vsub.s32 0, %v1171
        %v1173 = vrot.slane %v1011, %v1172
        %v1174 = vlaneseq
        %v1175 = vshrl.u32 %v1174, 7
        %v1176 = vsub.s32 0, %v1175
        %v1177 = vrot.slane %v994, %v1176
        %v1178 = vlaneseq
        %v1179 = vshrl.u32 %v1178, 7
        %v1180 = vsub.s32 0, %v1179
        %v1181 = vrot.slane %v1008, %v1180
        %v1182 = vlaneseq
        %v1183 = vshrl.u32 %v1182, 7
        %v1184 = vsub.s32 0, %v1183
        %v1185 = vrot.slane %v1010, %v1184
        %v1186 = vlaneseq
        %v1187 = vshrl.u32 %v1186, 7
        %v1188 = vsub.s32 0, %v1187
        %v1189 = vrot.slane %v1012, %v1188
        %v1190 = vlaneseq
        %v1191 = vshrl.u32 %v1190, 7
        %v1192 = vsub.s32 0, %v1191
        %v1193 = vrot.slane %v1036, %v1192
        %v1194 = vlaneseq
        %v1195 = vshrl.u32 %v1194, 7
        %v1196 = vsub.s32 0, %v1195
        %v1197 = vrot.slane %v1050, %v1196
        %v1198 = vlaneseq
        %v1199 = vshrl.u32 %v1198, 7
        %v1200 = vsub.s32 0, %v1199
        %v1201 = vrot.slane %v1058, %v1200
        %v1202 = vlaneseq
        %v1203 = vshrl.u32 %v1202, 7
        %v1204 = vsub.s32 0, %v1203
        %v1205 = vrot.slane %v1060, %v1204
        %v1206 = vlaneseq
        %v1207 = vshrl.u32 %v1206, 7
        %v1208 = vsub.s32 0, %v1207
        %v1209 = vrot.slane %v1043, %v1208
        %v1210 = vlaneseq
        %v1211 = vshrl.u32 %v1210, 7
        %v1212 = vsub.s32 0, %v1211
        %v1213 = vrot.slane %v1057, %v1212
        %v1214 = vlaneseq
        %v1215 = vshrl.u32 %v1214, 7
        %v1216 = vsub.s32 0, %v1215
        %v1217 = vrot.slane %v1059, %v1216
        %v1218 = vlaneseq
        %v1219 = vshrl.u32 %v1218, 7
        %v1220 = vsub.s32 0, %v1219
        %v1221 = vrot.slane %v1061, %v1220
        %v1262 = vadd.f32 %v415, %v1065
        %v1263 = vadd.f32 %v416, %v1069
        %v1264 = vadd.f32 %v417, %v1073
        %v1265 = vadd.f32 %v418, %v1077
        %v1266 = vadd.f32 %v419, %v1081
        %v1267 = vadd.f32 %v420, %v1085
        %v1268 = vadd.f32 %v421, %v1089
        %v1269 = vadd.f32 %v422, %v1093
        %v1270 = vadd.f32 %v423, %v1097
        %v1271 = vadd.f32 %v424, %v1101
        %v1272 = vadd.f32 %v425, %v1105
        %v1273 = vadd.f32 %v426, %v1109
        %v1274 = vadd.f32 %v427, %v1113
        %v1275 = vadd.f32 %v428, %v1117
        %v1276 = vadd.f32 %v429, %v1121
        %v1277 = vadd.f32 %v430, %v1125
        %v1278 = vadd.f32 %v431, %v1129
        %v1279 = vadd.f32 %v432, %v1133
        %v1280 = vadd.f32 %v433, %v1137
        %v1281 = vadd.f32 %v434, %v1141
        %v1282 = vadd.f32 %v435, %v1145
        %v1283 = vadd.f32 %v436, %v1149
        %v1284 = vadd.f32 %v437, %v1153
        %v1285 = vadd.f32 %v438, %v1157
        %v1286 = vadd.f32 %v439, %v1161
        %v1287 = vadd.f32 %v440, %v1165
        %v1288 = vadd.f32 %v441, %v1169
        %v1289 = vadd.f32 %v442, %v1173
        %v1290 = vadd.f32 %v443, %v1177
        %v1291 = vadd.f32 %v444, %v1181
        %v1292 = vadd.f32 %v445, %v1185
        %v1293 = vadd.f32 %v446, %v1189
        %v1294 = vadd.f32 %v447, %v1193
        %v1295 = vadd.f32 %v448, %v1197
        %v1296 = vadd.f32 %v449, %v1201
        %v1297 = vadd.f32 %v450, %v1205
        %v1298 = vadd.f32 %v451, %v1209
        %v1299 = vadd.f32 %v452, %v1213
        %v1300 = vadd.f32 %v453, %v1217
        %v1301 = vadd.f32 %v454, %v1221
        %v1302 = vmul.f32 %v1262, 0.9
        %v1303 = vmul.f32 %v1263, 0.9
        %v1304 = vmul.f32 %v1264, 0.9
        %v1305 = vmul.f32 %v1265, 0.9
        %v1306 = vmul.f32 %v1266, 0.9
        %v1307 = vmul.f32 %v1267, 0.9
        %v1308 = vmul.f32 %v1268, 0.9
        %v1309 = vmul.f32 %v1269, 0.9
        %v1310 = vmul.f32 %v1270, 0.9
        %v1311 = vmul.f32 %v1271, 0.9
        %v1312 = vmul.f32 %v1272, 0.9
        %v1313 = vmul.f32 %v1273, 0.9
        %v1314 = vmul.f32 %v1274, 0.9
        %v1315 = vmul.f32 %v1275, 0.9
        %v1316 = vmul.f32 %v1276, 0.9
        %v1317 = vmul.f32 %v1277, 0.9
        %v1318 = vmul.f32 %v1278, 0.9
        %v1319 = vmul.f32 %v1279, 0.9
        %v1320 = vmul.f32 %v1280, 0.9
        %v1321 = vmul.f32 %v1281, 0.9
        %v1322 = vmul.f32 %v1282, 0.9
        %v1323 = vmul.f32 %v1283, 0.9
        %v1324 = vmul.f32 %v1284, 0.9
        %v1325 = vmul.f32 %v1285, 0.9
        %v1326 = vmul.f32 %v1286, 0.9
        %v1327 = vmul.f32 %v1287, 0.9
        %v1328 = vmul.f32 %v1288, 0.9
        %v1329 = vmul.f32 %v1289, 0.9
        %v1330 = vmul.f32 %v1290, 0.9
        %v1331 = vmul.f32 %v1291, 0.9
        %v1332 = vmul.f32 %v1292, 0.9
        %v1333 = vmul.f32 %v1293, 0.9
        %v1334 = vmul.f32 %v1294, 0.9
        %v1335 = vmul.f32 %v1295, 0.9
        %v1336 = vmul.f32 %v1296, 0.9
        %v1337 = vmul.f32 %v1297, 0.9
        %v1338 = vmul.f32 %v1298, 0.9
        %v1339 = vmul.f32 %v1299, 0.9
        %v1340 = vmul.f32 %v1300, 0.9
        %v1341 = vmul.f32 %v1301, 0.9
        %v1342 = vld [vmem:[%s394] sm:$0xff]
        %v1343 = vld [vmem:[%s394 + $0x8] sm:$0xff]
        %v1344 = vld [vmem:[%s394 + $0x10] sm:$0xff]
        %v1345 = vld [vmem:[%s394 + $0x18] sm:$0xff]
        %v1346 = vld [vmem:[%s394 + $0x20] sm:$0xff]
        %v1347 = vld [vmem:[%s394 + $0x28] sm:$0xff]
        %v1348 = vld [vmem:[%s394 + $0x30] sm:$0xff]
        %v1349 = vld [vmem:[%s394 + $0x38] sm:$0xff]
        %v1350 = vld [vmem:[%s394 + $0x40] sm:$0xff]
        %v1351 = vld [vmem:[%s394 + $0x48] sm:$0xff]
        %v1352 = vld [vmem:[%s394 + $0x50] sm:$0xff]
        %v1353 = vld [vmem:[%s394 + $0x58] sm:$0xff]
        %v1354 = vld [vmem:[%s394 + $0x60] sm:$0xff]
        %v1355 = vld [vmem:[%s394 + $0x68] sm:$0xff]
        %v1356 = vld [vmem:[%s394 + $0x70] sm:$0xff]
        %v1357 = vld [vmem:[%s394 + $0x78] sm:$0xff]
        %v1358 = vld [vmem:[%s394 + $0x80] sm:$0xff]
        %v1359 = vld [vmem:[%s394 + $0x88] sm:$0xff]
        %v1360 = vld [vmem:[%s394 + $0x90] sm:$0xff]
        %v1361 = vld [vmem:[%s394 + $0x98] sm:$0xff]
        %v1362 = vld [vmem:[%s394 + $0xa0] sm:$0xff]
        %v1363 = vld [vmem:[%s394 + $0xa8] sm:$0xff]
        %v1364 = vld [vmem:[%s394 + $0xb0] sm:$0xff]
        %v1365 = vld [vmem:[%s394 + $0xb8] sm:$0xff]
        %v1366 = vld [vmem:[%s394 + $0xc0] sm:$0xff]
        %v1367 = vld [vmem:[%s394 + $0xc8] sm:$0xff]
        %v1368 = vld [vmem:[%s394 + $0xd0] sm:$0xff]
        %v1369 = vld [vmem:[%s394 + $0xd8] sm:$0xff]
        %v1370 = vld [vmem:[%s394 + $0xe0] sm:$0xff]
        %v1371 = vld [vmem:[%s394 + $0xe8] sm:$0xff]
        %v1372 = vld [vmem:[%s394 + $0xf0] sm:$0xff]
        %v1373 = vld [vmem:[%s394 + $0xf8] sm:$0xff]
        %v1374 = vld [vmem:[%s394 + $0x100] sm:$0xff]
        %v1375 = vld [vmem:[%s394 + $0x108] sm:$0xff]
        %v1376 = vld [vmem:[%s394 + $0x110] sm:$0xff]
        %v1377 = vld [vmem:[%s394 + $0x118] sm:$0xff]
        %v1378 = vld [vmem:[%s394 + $0x120] sm:$0xff]
        %v1379 = vld [vmem:[%s394 + $0x128] sm:$0xff]
        %v1380 = vld [vmem:[%s394 + $0x130] sm:$0xff]
        %v1381 = vld [vmem:[%s394 + $0x138] sm:$0xff]
        %v1382 = vmul.f32 %v1342, 0.1
        %v1383 = vmul.f32 %v1343, 0.1
        %v1384 = vmul.f32 %v1344, 0.1
        %v1385 = vmul.f32 %v1345, 0.1
        %v1386 = vmul.f32 %v1346, 0.1
        %v1387 = vmul.f32 %v1347, 0.1
        %v1388 = vmul.f32 %v1348, 0.1
        %v1389 = vmul.f32 %v1349, 0.1
        %v1390 = vmul.f32 %v1350, 0.1
        %v1391 = vmul.f32 %v1351, 0.1
        %v1392 = vmul.f32 %v1352, 0.1
        %v1393 = vmul.f32 %v1353, 0.1
        %v1394 = vmul.f32 %v1354, 0.1
        %v1395 = vmul.f32 %v1355, 0.1
        %v1396 = vmul.f32 %v1356, 0.1
        %v1397 = vmul.f32 %v1357, 0.1
        %v1398 = vmul.f32 %v1358, 0.1
        %v1399 = vmul.f32 %v1359, 0.1
        %v1400 = vmul.f32 %v1360, 0.1
        %v1401 = vmul.f32 %v1361, 0.1
        %v1402 = vmul.f32 %v1362, 0.1
        %v1403 = vmul.f32 %v1363, 0.1
        %v1404 = vmul.f32 %v1364, 0.1
        %v1405 = vmul.f32 %v1365, 0.1
        %v1406 = vmul.f32 %v1366, 0.1
        %v1407 = vmul.f32 %v1367, 0.1
        %v1408 = vmul.f32 %v1368, 0.1
        %v1409 = vmul.f32 %v1369, 0.1
        %v1410 = vmul.f32 %v1370, 0.1
        %v1411 = vmul.f32 %v1371, 0.1
        %v1412 = vmul.f32 %v1372, 0.1
        %v1413 = vmul.f32 %v1373, 0.1
        %v1414 = vmul.f32 %v1374, 0.1
        %v1415 = vmul.f32 %v1375, 0.1
        %v1416 = vmul.f32 %v1376, 0.1
        %v1417 = vmul.f32 %v1377, 0.1
        %v1418 = vmul.f32 %v1378, 0.1
        %v1419 = vmul.f32 %v1379, 0.1
        %v1420 = vmul.f32 %v1380, 0.1
        %v1421 = vmul.f32 %v1381, 0.1
        %v1422 = vadd.f32 %v1302, %v1382
        %v1423 = vadd.f32 %v1303, %v1383
        %v1424 = vadd.f32 %v1304, %v1384
        %v1425 = vadd.f32 %v1305, %v1385
        %v1426 = vadd.f32 %v1306, %v1386
        %v1427 = vadd.f32 %v1307, %v1387
        %v1428 = vadd.f32 %v1308, %v1388
        %v1429 = vadd.f32 %v1309, %v1389
        %v1430 = vadd.f32 %v1310, %v1390
        %v1431 = vadd.f32 %v1311, %v1391
        %v1432 = vadd.f32 %v1312, %v1392
        %v1433 = vadd.f32 %v1313, %v1393
        %v1434 = vadd.f32 %v1314, %v1394
        %v1435 = vadd.f32 %v1315, %v1395
        %v1436 = vadd.f32 %v1316, %v1396
        %v1437 = vadd.f32 %v1317, %v1397
        %v1438 = vadd.f32 %v1318, %v1398
        %v1439 = vadd.f32 %v1319, %v1399
        %v1440 = vadd.f32 %v1320, %v1400
        %v1441 = vadd.f32 %v1321, %v1401
        %v1442 = vadd.f32 %v1322, %v1402
        %v1443 = vadd.f32 %v1323, %v1403
        %v1444 = vadd.f32 %v1324, %v1404
        %v1445 = vadd.f32 %v1325, %v1405
        %v1446 = vadd.f32 %v1326, %v1406
        %v1447 = vadd.f32 %v1327, %v1407
        %v1448 = vadd.f32 %v1328, %v1408
        %v1449 = vadd.f32 %v1329, %v1409
        %v1450 = vadd.f32 %v1330, %v1410
        %v1451 = vadd.f32 %v1331, %v1411
        %v1452 = vadd.f32 %v1332, %v1412
        %v1453 = vadd.f32 %v1333, %v1413
        %v1454 = vadd.f32 %v1334, %v1414
        %v1455 = vadd.f32 %v1335, %v1415
        %v1456 = vadd.f32 %v1336, %v1416
        %v1457 = vadd.f32 %v1337, %v1417
        %v1458 = vadd.f32 %v1338, %v1418
        %v1459 = vadd.f32 %v1339, %v1419
        %v1460 = vadd.f32 %v1340, %v1420
        %v1461 = vadd.f32 %v1341, %v1421
        %1462 = vst [vmem:[%s361] sm:$0xff] %v1422
        %1463 = vst [vmem:[%s361 + $0x8] sm:$0xff] %v1423
        %1464 = vst [vmem:[%s361 + $0x10] sm:$0xff] %v1424
        %1465 = vst [vmem:[%s361 + $0x18] sm:$0xff] %v1425
        %1466 = vst [vmem:[%s361 + $0x20] sm:$0xff] %v1426
        %1467 = vst [vmem:[%s361 + $0x28] sm:$0xff] %v1427
        %1468 = vst [vmem:[%s361 + $0x30] sm:$0xff] %v1428
        %1469 = vst [vmem:[%s361 + $0x38] sm:$0xff] %v1429
        %1470 = vst [vmem:[%s361 + $0x40] sm:$0xff] %v1430
        %1471 = vst [vmem:[%s361 + $0x48] sm:$0xff] %v1431
        %1472 = vst [vmem:[%s361 + $0x50] sm:$0xff] %v1432
        %1473 = vst [vmem:[%s361 + $0x58] sm:$0xff] %v1433
        %1474 = vst [vmem:[%s361 + $0x60] sm:$0xff] %v1434
        %1475 = vst [vmem:[%s361 + $0x68] sm:$0xff] %v1435
        %1476 = vst [vmem:[%s361 + $0x70] sm:$0xff] %v1436
        %1477 = vst [vmem:[%s361 + $0x78] sm:$0xff] %v1437
        %1478 = vst [vmem:[%s361 + $0x80] sm:$0xff] %v1438
        %1479 = vst [vmem:[%s361 + $0x88] sm:$0xff] %v1439
        %1480 = vst [vmem:[%s361 + $0x90] sm:$0xff] %v1440
        %1481 = vst [vmem:[%s361 + $0x98] sm:$0xff] %v1441
        %1482 = vst [vmem:[%s361 + $0xa0] sm:$0xff] %v1442
        %1483 = vst [vmem:[%s361 + $0xa8] sm:$0xff] %v1443
        %1484 = vst [vmem:[%s361 + $0xb0] sm:$0xff] %v1444
        %1485 = vst [vmem:[%s361 + $0xb8] sm:$0xff] %v1445
        %1486 = vst [vmem:[%s361 + $0xc0] sm:$0xff] %v1446
        %1487 = vst [vmem:[%s361 + $0xc8] sm:$0xff] %v1447
        %1488 = vst [vmem:[%s361 + $0xd0] sm:$0xff] %v1448
        %1489 = vst [vmem:[%s361 + $0xd8] sm:$0xff] %v1449
        %1490 = vst [vmem:[%s361 + $0xe0] sm:$0xff] %v1450
        %1491 = vst [vmem:[%s361 + $0xe8] sm:$0xff] %v1451
        %1492 = vst [vmem:[%s361 + $0xf0] sm:$0xff] %v1452
        %1493 = vst [vmem:[%s361 + $0xf8] sm:$0xff] %v1453
        %1494 = vst [vmem:[%s361 + $0x100] sm:$0xff] %v1454
        %1495 = vst [vmem:[%s361 + $0x108] sm:$0xff] %v1455
        %1496 = vst [vmem:[%s361 + $0x110] sm:$0xff] %v1456
        %1497 = vst [vmem:[%s361 + $0x118] sm:$0xff] %v1457
        %1498 = vst [vmem:[%s361 + $0x120] sm:$0xff] %v1458
        %1499 = vst [vmem:[%s361 + $0x128] sm:$0xff] %v1459
        %1500 = vst [vmem:[%s361 + $0x130] sm:$0xff] %v1460
        %1501 = vst [vmem:[%s361 + $0x138] sm:$0xff] %v1461
        %s1502 = sand.u32 %s141, 1
        %s1503 = scalar_lea.sflag [#allocation4], %s1502
        %s1504 = sand.u32 %s141, 1
        %s1505 = smul.addr %s1504, 40
        %s1506 = scalar_lea.vmem [#allocation7], %s1505
        %s1507 = sand.u32 %s167, 1
        %s1508 = scalar_lea.sflag [#allocation9], %s1507
        %s1509 = sand.u32 %s167, 1
        %s1510 = smul.addr %s1509, 320
        %s1511 = scalar_lea.vmem [#allocation8], %s1510
        // Predicated region
        $region45: #{graph_appnp.1} parent=35 // pred_check
          %p1512 = pneg %p151
        $region46: #{graph_appnp.1} parent=35 // pred_check_branch
          %1514 = sbr.rel (%p1512) target = $region48
        $region47: #{graph_appnp.1} parent=35 // pred_region
          %s1515 = smul.u32 5, %s29
          %s1516 = ssub.s32 9, %s1515
          %p1517 = scmp.lt.s32.totalorder %s1516, 5
          %s1518 = scalar_select %p1517, %s1516, 5
          %s1519 = smul.u32 128, %s1518
          %s1521 = ssub.s32 640, %s1519
          %1522 = vsyncadd %s1503, %s1521
          %p1523 = scmp.ne.s32.totalorder 0, %s1519
          %s1524 = smul.addr %s1515, 128
          %s1525 = scalar_lea.hbm %s4, %s1524
          %s1526 = smul.u32 8, %s1518
          %s1527 = sshll.u32 %s1506, 4
          %s1528 = int_to_ptr.vmem [resolvable:$true] %s1527
          %s1529 = sshll.u32 %s1526, 4
          %1533 = dma.vmem_to_hbm [thread:$0]  (%p1523), %s1528, %s1529, %s1525, %s1503, 128, 128, 8
        $region48: #{graph_appnp.1} parent=35 // pred_fallthru
          _
        // Predicated region
        $region49: #{graph_appnp.1} parent=35 // pred_check
          %p1534 = pneg %p177
        $region50: #{graph_appnp.1} parent=35 // pred_check_branch
          %1536 = sbr.rel (%p1534) target = $region52
        $region51: #{graph_appnp.1} parent=35 // pred_region
          %s1537 = smul.u32 40, %s29
          %s1538 = ssub.s32 72, %s1537
          %p1539 = scmp.lt.s32.totalorder %s1538, 40
          %s1540 = scalar_select %p1539, %s1538, 40
          %s1541 = smul.u32 128, %s1540
          %s1543 = ssub.s32 5120, %s1541
          %1544 = vsyncadd %s1508, %s1543
          %p1545 = scmp.ne.s32.totalorder 0, %s1541
          %s1546 = smul.addr %s1537, 128
          %s1547 = scalar_lea.hbm %s5, %s1546
          %s1548 = smul.u32 8, %s1540
          %s1549 = sshll.u32 %s1511, 4
          %s1550 = int_to_ptr.vmem [resolvable:$true] %s1549
          %s1551 = sshll.u32 %s1548, 4
          %1555 = dma.vmem_to_hbm [thread:$0]  (%p1545), %s1550, %s1551, %s1547, %s1508, 128, 128, 8
        $region52: #{graph_appnp.1} parent=35 // pred_fallthru
          _
      $region36: #{graph_appnp.1} parent=5 // pred_fallthru
        _
      %p1556 = scmp.le.s32.totalorder 2, %s24
      // Predicated region
      $region53: #{graph_appnp.1} parent=5 // pred_check
        %p1557 = pneg %p1556
      $region54: #{graph_appnp.1} parent=5 // pred_check_branch
        %1559 = sbr.rel (%p1557) target = $region56
      $region55: #{graph_appnp.1} parent=5 // pred_region
        %s1560 = ssub.s32 %s24, 2
        // Predicated region
        $region57: #{graph_appnp.1} parent=55 // pred_check
          %p1561 = pneg %p157
        $region58: #{graph_appnp.1} parent=55 // pred_check_branch
          %1563 = sbr.rel (%p1561) target = $region60
        $region59: #{graph_appnp.1} parent=55 // pred_region
          %s1564 = sand.u32 %s142, 1
          %s1565 = scalar_lea.sflag [#allocation4], %s1564
          %s1566 = sand.u32 %s142, 1
          %s1567 = smul.addr %s1566, 40
          %s1568 = scalar_lea.vmem [#allocation7], %s1567
          %1569 = dma.done %s1565, 640
        $region60: #{graph_appnp.1} parent=55 // pred_fallthru
          _
        // Predicated region
        $region61: #{graph_appnp.1} parent=55 // pred_check
          %p1570 = pneg %p183
        $region62: #{graph_appnp.1} parent=55 // pred_check_branch
          %1572 = sbr.rel (%p1570) target = $region64
        $region63: #{graph_appnp.1} parent=55 // pred_region
          %s1573 = sand.u32 %s168, 1
          %s1574 = scalar_lea.sflag [#allocation9], %s1573
          %s1575 = sand.u32 %s168, 1
          %s1576 = smul.addr %s1575, 320
          %s1577 = scalar_lea.vmem [#allocation8], %s1576
          %1578 = dma.done %s1574, 5120
        $region64: #{graph_appnp.1} parent=55 // pred_fallthru
          _
      $region56: #{graph_appnp.1} parent=5 // pred_fallthru
        _
    $region6: #{graph_appnp.1} parent=1 // loop_footer
      %s28 = sadd.s32 1, %s24
    $region7: #{graph_appnp.1} parent=1 // loop_footer_branch
      %23 = sbr.rel target = $region3
    $region8: #{graph_appnp.1} parent=1 // loop_exit
      _
    %1579 = vsyncpa [#allocation3], 1
    %s1580 = scalar_lea.sflag [#allocation3], 1
    %1581 = vsyncpa %s1580, 1
    %1582 = vsyncpa [#allocation6], 1
    %s1583 = scalar_lea.sflag [#allocation6], 1
    %1584 = vsyncpa %s1583, 1
    %1585 = vsyncpa [#allocation4], 1
    %s1586 = scalar_lea.sflag [#allocation4], 1
    %1587 = vsyncpa %s1586, 1
    %1588 = vsyncpa [#allocation9], 1
    %s1589 = scalar_lea.sflag [#allocation9], 1
    %1590 = vsyncpa %s1589, 1

</llo_original>
